<compile_context>
chip_gen: v7x
topology: tpu7x:2x2x1
jax: 0.10.0
libtpu: 0.0.40
codegen_flags: <defaults>
</compile_context>

<pallas_src>
import functools

import jax
import jax.numpy as jnp
from jax.experimental import pallas as pl
from jax.experimental.pallas import tpu as pltpu

LANES = 128                     # lane width (last dim)
SUBLANES = 8                    # sublane rows per vreg
VREG_ELEMS = SUBLANES * LANES   # 1024
TM_MAX = 4096                   # rows per tile: 4096*128*4B = 2 MiB f32 per input buffer
MIN_PALLAS_ELEMS = 1 << 16      # below this, a plain jnp reduce beats pallas_call overhead


def _softplus(x):
    # numerically stable softplus (f32 everywhere; safe on v5e which has no bf16 EUP)
    return jnp.maximum(x, 0.0) + jnp.log1p(jnp.exp(-jnp.abs(x)))


def _make_elem_fn(gan_type, target_is_real, is_disc, real_label_val, fake_label_val):
    """Per-element transform g(x) such that loss (pre-weight) == mean(g(x))."""
    if gan_type == 'vanilla':
        # BCEWithLogits(x, t) = softplus(x) - t * x  (t constant)
        t = real_label_val if target_is_real else fake_label_val
        return lambda x: _softplus(x) - t * x
    if gan_type == 'lsgan':
        t = real_label_val if target_is_real else fake_label_val
        return lambda x: (x - t) * (x - t)
    if gan_type == 'wgan':
        return (lambda x: -x) if target_is_real else (lambda x: x)
    if gan_type == 'wgan_softplus':
        return (lambda x: _softplus(-x)) if target_is_real else (lambda x: _softplus(x))
    if gan_type == 'hinge':
        if is_disc:
            if target_is_real:
                return lambda x: jnp.maximum(1.0 - x, 0.0)   # relu(1 + (-x))
            return lambda x: jnp.maximum(1.0 + x, 0.0)        # relu(1 + x)
        return lambda x: -x                                   # generator: -mean(x)
    raise NotImplementedError(f'GAN type {gan_type} is not implemented.')


def _gan_sum_kernel(elem_fn, rows_last, x_ref, out_ref):
    """Accumulate sum(elem_fn(x)) into a resident (8, 128) f32 partial.

    `rows_last` is the STATIC number of valid rows in the final tile (a multiple
    of 8).  All other tiles are full, so there is no dynamic masking anywhere.
    """
    t = pl.program_id(0)

    @pl.when(t == 0)
    def _():
        out_ref[...] = jnp.zeros_like(out_ref)

    tm, lanes = x_ref.shape   # static block shape

    def _accum(nrows):
        # Static sublane-aligned slice of the VMEM view (zero runtime cost).
        val = elem_fn(x_ref[:nrows, :].astype(jnp.float32))
        # reshape+sum(axis=0) is VALU-only vreg adds; keeps the XLU out of the loop.
        out_ref[...] += val.reshape(nrows // SUBLANES, SUBLANES, lanes).sum(axis=0)

    if rows_last == tm:
        # Every tile (including the last) is full: single straight-line path.
        _accum(tm)
    else:
        nt = pl.num_programs(0)

        @pl.when(t < nt - 1)
        def _():
            _accum(tm)

        @pl.when(t == nt - 1)
        def _():
            _accum(rows_last)


def _pallas_masked_mean(elem_fn, x, min_pallas_elems=MIN_PALLAS_ELEMS):
    """mean(elem_fn(x)) over all elements of x."""
    n = int(x.size)
    n_main = (n // VREG_ELEMS) * VREG_ELEMS   # 1024-aligned prefix handled by the kernel

    # Small / degenerate inputs: pallas_call fixed cost dominates -> plain jnp.
    if n_main == 0 or n < min_pallas_elems:
        return jnp.mean(elem_fn(x.reshape(-1).astype(jnp.float32)))

    flat = x.reshape(-1)                       # no astype: kernel casts per-tile
    x2d = flat[:n_main].reshape(-1, LANES)     # (rows, 128), rows % 8 == 0
    rows = x2d.shape[0]

    tm = min(TM_MAX, rows)                     # multiple of 8 by construction
    tiles = -(-rows // tm)
    rows_last = rows - (tiles - 1) * tm        # static; multiple of 8; in [8, tm]

    kernel = functools.partial(_gan_sum_kernel, elem_fn, rows_last)
    partial_sums = pl.pallas_call(
        kernel,
        out_shape=jax.ShapeDtypeStruct((SUBLANES, LANES), jnp.float32),
        grid_spec=pltpu.PrefetchScalarGridSpec(
            num_scalar_prefetch=0,
            grid=(tiles,),
            in_specs=[pl.BlockSpec((tm, LANES), lambda t: (t, 0))],
            out_specs=pl.BlockSpec((SUBLANES, LANES), lambda t: (0, 0)),
        ),
        compiler_params=pltpu.CompilerParams(
            dimension_semantics=("arbitrary",)),   # output is a resident accumulator
    )(x2d)

    total = jnp.sum(partial_sums)

    # Misaligned tail (< 1024 elements): trivial jnp reduce, no full-array pad copy.
    if n_main < n:
        total = total + jnp.sum(elem_fn(flat[n_main:].astype(jnp.float32)))

    return total / jnp.float32(n)


class GANLossPallas:
    """JAX/Pallas re-implementation of the PyTorch GANLoss forward pass."""

    def __init__(self, gan_type, real_label_val=1.0, fake_label_val=0.0,
                 loss_weight=1.0, min_pallas_elems=MIN_PALLAS_ELEMS):
        self.gan_type = gan_type
        self.real_label_val = float(real_label_val)
        self.fake_label_val = float(fake_label_val)
        self.loss_weight = float(loss_weight)
        self.min_pallas_elems = int(min_pallas_elems)
        if gan_type not in ('vanilla', 'lsgan', 'wgan', 'wgan_softplus', 'hinge'):
            raise NotImplementedError(f'GAN type {gan_type} is not implemented.')

    def __call__(self, x, target_is_real, is_disc=False):
        elem_fn = _make_elem_fn(self.gan_type, bool(target_is_real), bool(is_disc),
                                self.real_label_val, self.fake_label_val)
        loss = _pallas_masked_mean(elem_fn, x, self.min_pallas_elems)
        # loss_weight only applies to the generator (matches the PyTorch module).
        return loss if is_disc else loss * jnp.float32(self.loss_weight)


# ---------------------------------------------------------------------------
# Pure-JAX reference (mirrors the PyTorch semantics) for correctness checking.
# ---------------------------------------------------------------------------
def _ref_gan_loss(gan_type, x, target_is_real, is_disc,
                  real_label_val=1.0, fake_label_val=0.0, loss_weight=1.0):
    x = x.astype(jnp.float32)
    if gan_type in ('wgan', 'wgan_softplus'):
        if gan_type == 'wgan':
            loss = -jnp.mean(x) if target_is_real else jnp.mean(x)
        else:
            loss = jnp.mean(jax.nn.softplus(-x)) if target_is_real else jnp.mean(jax.nn.softplus(x))
    elif gan_type == 'hinge':
        if is_disc:
            xi = -x if target_is_real else x
            loss = jnp.mean(jax.nn.relu(1.0 + xi))
        else:
            loss = -jnp.mean(x)
    else:
        t = real_label_val if target_is_real else fake_label_val
        if gan_type == 'vanilla':
            loss = jnp.mean(jax.nn.softplus(x) - t * x)
        else:  # lsgan
            loss = jnp.mean((x - t) ** 2)
    return loss if is_disc else loss * loss_weight


if __name__ == "__main__":
    key = jax.random.PRNGKey(0)
    k1, k2 = jax.random.split(key)
    # NCHW discriminator logits (small shape consistent with the module) ...
    x_main = jax.random.normal(k1, (2, 4, 16, 16), dtype=jnp.float32)
    # ... plus a misaligned-size input to exercise the aligned-prefix + jnp-tail path.
    x_tail = jax.random.normal(k2, (2, 3, 17, 31), dtype=jnp.float32)

    configs = []
    for gan_type in ('vanilla', 'lsgan', 'wgan', 'wgan_softplus', 'hinge'):
        for target_is_real in (True, False):
            for is_disc in (True, False):
                configs.append((gan_type, target_is_real, is_disc))

    ok = True
    for x in (x_main, x_tail):
        for gan_type, target_is_real, is_disc in configs:
            # min_pallas_elems=0 forces the Pallas kernel path even for tiny inputs.
            mod = GANLossPallas(gan_type, real_label_val=1.0, fake_label_val=0.0,
                                loss_weight=2.0, min_pallas_elems=0)
            got = jax.block_until_ready(mod(x, target_is_real, is_disc=is_disc))
            want = _ref_gan_loss(gan_type, x, target_is_real, is_disc, 1.0, 0.0, 2.0)
            if not jnp.allclose(got, want, rtol=1e-5, atol=1e-5):
                ok = False
                print(f"MISMATCH shape={x.shape} {gan_type} real={target_is_real} "
                      f"disc={is_disc}: {got} vs {want}")

    if ok:
        print("KERNEL_OK")
</pallas_src>

<mosaic_0001>
module attributes {stable_mosaic.version = 11 : i64} {
  func.func @_gan_sum_kernel(%arg0: i32, %arg1: memref<16x128xf32, #tpu.memory_space<vmem>>, %arg2: memref<8x128xf32, #tpu.memory_space<vmem>>) attributes {dimension_semantics = [#tpu.dimension_semantics<arbitrary>], iteration_bounds = array<i64: 1>, scalar_prefetch = 0 : i64, scratch_operands = 0 : i64, tpu.core_type = #tpu.core_type<tc>, window_params = [{transform_indices = @transform_0, window_bounds = array<i64: 16, 128>}, {pipeline_mode = #tpu.pipeline_mode<synchronous>, transform_indices = @transform_1, window_bounds = array<i64: 8, 128>}]} {
    %c0_i32 = arith.constant 0 : i32
    %0 = arith.cmpi eq, %arg0, %c0_i32 : i32
    %1 = arith.extui %0 : i1 to i32
    %c0_i32_0 = arith.constant 0 : i32
    %2 = arith.cmpi ne, %1, %c0_i32_0 : i32
    scf.if %2 {
      %cst_9 = arith.constant 0.000000e+00 : f32
      %20 = vector.broadcast %cst_9 : f32 to vector<8x128xf32>
      %c0_10 = arith.constant 0 : index
      %c0_11 = arith.constant 0 : index
      %21 = vector.load %arg2[%c0_10, %c0_11] : memref<8x128xf32, #tpu.memory_space<vmem>>, vector<8x128xf32>
      tpu.vector_store %arg2[%c0_10, %c0_11], %20 {strides = array<i32>} : memref<8x128xf32, #tpu.memory_space<vmem>>, vector<8x128xf32>,
    } else {
    }
    %c0 = arith.constant 0 : index
    %c0_1 = arith.constant 0 : index
    %3 = vector.load %arg1[%c0, %c0_1] : memref<16x128xf32, #tpu.memory_space<vmem>>, vector<16x128xf32>
    %cst = arith.constant 0.000000e+00 : f32
    %4 = vector.broadcast %cst : f32 to vector<16x128xf32>
    %5 = arith.maximumf %3, %4 : vector<16x128xf32>
    %6 = math.absf %3 : vector<16x128xf32>
    %cst_2 = arith.constant 0.000000e+00 : f32
    %7 = vector.broadcast %cst_2 : f32 to vector<16x128xf32>
    %8 = arith.subf %7, %6 : vector<16x128xf32>
    %9 = math.exp %8 : vector<16x128xf32>
    %10 = math.log1p %9 : vector<16x128xf32>
    %11 = arith.addf %5, %10 : vector<16x128xf32>
    %cst_3 = arith.constant 1.000000e+00 : f32
    %12 = vector.broadcast %cst_3 : f32 to vector<16x128xf32>
    %13 = arith.mulf %12, %3 : vector<16x128xf32>
    %14 = arith.subf %11, %13 : vector<16x128xf32>
    %c0_4 = arith.constant 0 : index
    %c0_5 = arith.constant 0 : index
    %15 = vector.load %arg2[%c0_4, %c0_5] : memref<8x128xf32, #tpu.memory_space<vmem>>, vector<8x128xf32>
    %16 = vector.shape_cast %14 : vector<16x128xf32> to vector<2x8x128xf32>
    %cst_6 = arith.constant dense<0.000000e+00> : vector<8x128xf32>
    %17 = vector.multi_reduction <add>, %16, %cst_6 [0] : vector<2x8x128xf32> to vector<8x128xf32>
    %18 = arith.addf %15, %17 : vector<8x128xf32>
    %c0_7 = arith.constant 0 : index
    %c0_8 = arith.constant 0 : index
    %19 = vector.load %arg2[%c0_7, %c0_8] : memref<8x128xf32, #tpu.memory_space<vmem>>, vector<8x128xf32>
    tpu.vector_store %arg2[%c0_7, %c0_8], %18 {strides = array<i32>} : memref<8x128xf32, #tpu.memory_space<vmem>>, vector<8x128xf32>,
    return
  }
  func.func @transform_0(%arg0: i32) -> (i32, i32) {
    %c0_i32 = arith.constant 0 : i32
    %c0_i32_0 = arith.constant 0 : i32
    return %arg0, %c0_i32 : i32, i32
  }
  func.func @transform_1(%arg0: i32) -> (i32, i32) {
    %c0_i32 = arith.constant 0 : i32
    %c0_i32_0 = arith.constant 0 : i32
    %c0_i32_1 = arith.constant 0 : i32
    return %c0_i32, %c0_i32_0 : i32, i32
  }
}

</mosaic_0001>

<llo_original>
// kernel: tpu_custom_call.1
$region0: #{tpu_custom_call.1}
  #allocation0 [shape = 'u32[]', space=smem, size = 0x4, offset = 0x4, fixed_abs, tag = 'smem constant byte address 0x4 - core index']
  #allocation1 [shape = 'u32[144,128]{1,0:T(1,128)}', space=vmem, size = 0x12000, scoped, tag = 'internal scratch']
  %s0 = inlined_call_operand.hbm [shape: f32[16,128], index: 0, kind: input, shape index: {}]
  %s1 = inlined_call_operand.hbm [shape: f32[8,128], index: 1, kind: output, shape index: {}]
  %s2 = sld [smem:[#allocation0]]
  $region22: #{tpu_custom_call.1} parent=0
    _
  %s4 = ssub.s32 1, %s2
  %s5 = scalar_select 0, %s4, %s2
  $region1: #{tpu_custom_call.1} parent=0
    #allocation2 [shape = 'u8[8192]{0}', space=vmem, size = 0x2000, scoped, tag = 'input window, operand 0, single buffered']
    #allocation3 [shape = 's32[1]{0}', space=sflag, size = 0x4, scoped, tag = 'scoped memory for tpu_custom_call.1']
    #allocation4 [shape = 's32[1]{0}', space=sflag, size = 0x4, scoped, tag = 'scoped memory for tpu_custom_call.1']
    #allocation5 [shape = 'u8[4096]{0}', space=vmem, size = 0x1000, scoped, tag = 'output window, operand 0, single buffered']
    %6 = vsyncpa [#allocation3], 0
    %7 = vsyncpa [#allocation4], 0
    // Predicated region
    $region2: #{tpu_custom_call.1} parent=1 // pred_check
      _
    $region3: #{tpu_custom_call.1} parent=1 // pred_check_branch
      %9 = sbr.rel (0) target = $region5
    $region4: #{tpu_custom_call.1} parent=1 // pred_region
      %s11 = ssub.s32 256, 256
      %12 = vsyncadd [#allocation3], %s11
      %s13 = sshll.u32 [#allocation2], 4
      %s14 = int_to_ptr.vmem [resolvable:$true] %s13
      %19 = dma.hbm_to_vmem [thread:$0]  %s0, 256, %s14, [#allocation3], 128, 128, 8
    $region5: #{tpu_custom_call.1} parent=1 // pred_fallthru
      _
    // Predicated region
    $region6: #{tpu_custom_call.1} parent=1 // pred_check
      _
    $region7: #{tpu_custom_call.1} parent=1 // pred_check_branch
      %21 = sbr.rel (0) target = $region9
    $region8: #{tpu_custom_call.1} parent=1 // pred_region
      %22 = dma.done [#allocation3], 256
    $region9: #{tpu_custom_call.1} parent=1 // pred_fallthru
      _
    %p23 = scmp.eq.s32.totalorder 0, 0
    // Predicated region
    $region10: #{tpu_custom_call.1} parent=1 // pred_check
      %p24 = pneg %p23
    $region11: #{tpu_custom_call.1} parent=1 // pred_check_branch
      %26 = sbr.rel (%p24) target = $region13
    $region12: #{tpu_custom_call.1} parent=1 // pred_region
      %27 = vst [vmem:[#allocation5] sm:$0xff] 0.0
    $region13: #{tpu_custom_call.1} parent=1 // pred_fallthru
      _
    %v28 = vld [vmem:[#allocation2] sm:$0xff]
    %v29 = vld [vmem:[#allocation2 + $0x8] sm:$0xff]
    %v30 = vmax.f32 %v28, 0.0
    %v31 = vmax.f32 %v29, 0.0
    %v32 = vand.u32 2147483647, %v28
    %v33 = vand.u32 2147483647, %v29
    %v34 = vsub.f32 0.0, %v32
    %v35 = vsub.f32 0.0, %v33
    %v36 = vmul.f32 %v34, 1.442695
    %v37 = vpow.pop %v36
    %v38 = vmul.f32 %v35, 1.442695
    %v39 = vpow.pop %v38
    %v40 = vadd.f32 %v37, 1.0
    %v41 = vlog2.pop %v40
    %v42 = vmul.f32 %v41, 0.6931472
    %v43 = vmul.f32 -0.5, %v37
    %v44 = vadd.f32 %v43, 1.0
    %v45 = vmul.f32 %v44, %v37
    %v46 = vand.u32 2147483647, %v37
    %vm47 = vcmp.lt.f32.partialorder %v46, 0.0004427343
    %v48 = vsel %vm47, %v45, %v42
    %v49 = vadd.f32 %v39, 1.0
    %v50 = vlog2.pop %v49
    %v51 = vmul.f32 %v50, 0.6931472
    %v52 = vmul.f32 -0.5, %v39
    %v53 = vadd.f32 %v52, 1.0
    %v54 = vmul.f32 %v53, %v39
    %v55 = vand.u32 2147483647, %v39
    %vm56 = vcmp.lt.f32.partialorder %v55, 0.0004427343
    %v57 = vsel %vm56, %v54, %v51
    %v58 = vadd.f32 %v30, %v48
    %v59 = vadd.f32 %v31, %v57
    %v60 = vsub.f32 %v58, %v28
    %v61 = vsub.f32 %v59, %v29
    %v62 = vld [vmem:[#allocation5] sm:$0xff]
    %v63 = vadd.f32 %v60, %v61
    %v64 = vadd.f32 %v62, %v63
    %65 = vst [vmem:[#allocation5] sm:$0xff] %v64
    // Predicated region
    $region14: #{tpu_custom_call.1} parent=1 // pred_check
      _
    $region15: #{tpu_custom_call.1} parent=1 // pred_check_branch
      %67 = sbr.rel (0) target = $region17
    $region16: #{tpu_custom_call.1} parent=1 // pred_region
      %s69 = ssub.s32 128, 128
      %70 = vsyncadd [#allocation4], %s69
      %s72 = sshll.u32 [#allocation5], 4
      %s73 = int_to_ptr.vmem [resolvable:$true] %s72
      %75 = dma.vmem_to_hbm [thread:$0]  %s73, 128, %s1, [#allocation4]
    $region17: #{tpu_custom_call.1} parent=1 // pred_fallthru
      _
    // Predicated region
    $region18: #{tpu_custom_call.1} parent=1 // pred_check
      _
    $region19: #{tpu_custom_call.1} parent=1 // pred_check_branch
      %77 = sbr.rel (0) target = $region21
    $region20: #{tpu_custom_call.1} parent=1 // pred_region
      %78 = dma.done [#allocation4], 128
    $region21: #{tpu_custom_call.1} parent=1 // pred_fallthru
      _
    %79 = vsyncpa [#allocation3], 1
    %80 = vsyncpa [#allocation4], 1

</llo_original>
